<compile_context>
chip_gen: v7x
topology: tpu7x:2x2x1
jax: 0.10.0
libtpu: 0.0.40
codegen_flags: <defaults>
</compile_context>

<pallas_src>
import functools

import jax
import jax.numpy as jnp
from jax.experimental import pallas as pl
from jax.experimental.pallas import tpu as pltpu


def _round_up(x, m):
    return -(-x // m) * m


def _gram_partial_kernel(f_ref, part_ref, *, hw, tk, bpp, need_mask, use_bf16):
    # f_ref:    (NC, tk)     f32 feature tile (lane axis = HW tile)
    # part_ref: (1, NC, NC)  f32 partial Gram, resident across the k axis
    k = pl.program_id(1)

    @pl.when(k == 0)
    def _():
        part_ref[...] = jnp.zeros_like(part_ref)

    f = f_ref[...]                                       # f32, straight from HBM
    if need_mask:
        # Zero out lanes past the true HW extent (ragged tail tile, or the
        # clamped duplicate tile on an odd 2-way split).
        start = (pl.program_id(0) * bpp + k) * tk
        col = jax.lax.broadcasted_iota(jnp.int32, f.shape, 1)
        f = jnp.where(col < (hw - start), f, 0.0)
    if use_bf16:
        f = f.astype(jnp.bfloat16)                       # VPU cast hides under DMA

    # F @ F^T over this HW tile, f32 accumulation on the MXU.
    # NOTE: contraction on rhs dim 1 (transposed operand); if the Mosaic bundle
    # shows a per-step vxpose and XLU becomes the binding slot, pre-transpose
    # once into a (tk, NC) scratch instead.
    part_ref[...] += jax.lax.dot_general(
        f, f,
        dimension_numbers=(((1,), (1,)), ((), ())),
        preferred_element_type=jnp.float32,
    )[jnp.newaxis]


def _combine_mse_kernel(part_ref, t_ref, loss_ref, *, inv_norm, final_scale):
    # part_ref: (num_parts, NC, NC) f32; t_ref: (NC, NC) f32; loss_ref: (1, 1) f32
    g = jnp.sum(part_ref[...], axis=0) * inv_norm        # G = (F F^T) / (NC*HW)
    d = g - t_ref[...]
    # MSE(G*w, T*w) = w^2 * mean((G - T)^2); scalars folded at trace time.
    loss_ref[...] = jnp.sum(d * d, keepdims=True) * final_scale


def style_loss(x, target_gram, weight, *, tk=None, use_bf16_mxu=True):
    """x: (N, C, H, W) float; target_gram: (N*C, N*C); weight: python scalar."""
    n, c, h, w = x.shape
    nc, hw = n * c, h * w

    # Contiguous NCHW -> (NC, HW) reshape is a bitcast; no host-side copy/pad.
    f = x.astype(jnp.float32).reshape(nc, hw)
    t = target_gram.astype(jnp.float32)

    # ---- per-generation VMEM budget (v7x: 64 MiB/TC, v5e/v6e: 128 MiB) ----
    try:
        vmem_cap = int(pltpu.get_tpu_info().vmem_capacity_bytes)
    except Exception:  # pragma: no cover - conservative fallback
        vmem_cap = 64 << 20
    budget = int(min(max(vmem_cap * 3 // 5, 16 << 20), 100 << 20))

    # ---- contraction tile: as large as the F double-buffer budget allows ----
    if tk is None:
        f_budget = budget - 2 * nc * nc * 4 - (2 << 20)   # 2 partial-out buffers + slack
        tk = max(512, (f_budget // (2 * nc * 4)) // 512 * 512)
        tk = min(tk, 8192)                                 # keeps worst case well under 64 MiB
    else:
        tk = max(128, _round_up(int(tk), 128))
    tk = max(128, min(tk, _round_up(hw, 128)))

    total_blocks = -(-hw // tk)
    num_parts = 2 if total_blocks >= 2 else 1              # one HW half per TensorCore (v7x)
    bpp = -(-total_blocks // num_parts)                    # blocks per part
    need_mask = (num_parts * bpp * tk != hw)

    if num_parts * bpp > total_blocks:
        # Odd split: part 1's extra step re-reads the last valid block (clamped
        # index) and the in-kernel mask zeroes its contribution.
        f_index = lambda p, k: (0, jnp.minimum(p * bpp + k, total_blocks - 1))
    else:
        f_index = lambda p, k: (0, p * bpp + k)

    vmem_est = 2 * nc * tk * 4 + 2 * nc * nc * 4 + (2 << 20)
    vmem_limit = int(max(min(2 * vmem_est, budget), vmem_est, 16 << 20))

    kernel1 = functools.partial(
        _gram_partial_kernel,
        hw=hw, tk=tk, bpp=bpp, need_mask=need_mask, use_bf16=use_bf16_mxu)

    partials = pl.pallas_call(
        kernel1,
        out_shape=jax.ShapeDtypeStruct((num_parts, nc, nc), jnp.float32),
        grid_spec=pltpu.PrefetchScalarGridSpec(
            num_scalar_prefetch=0,
            grid=(num_parts, bpp),
            in_specs=[pl.BlockSpec((nc, tk), f_index)],                 # stream F along HW
            out_specs=pl.BlockSpec((1, nc, nc), lambda p, k: (p, 0, 0)),  # resident accumulator
        ),
        compiler_params=pltpu.CompilerParams(
            dimension_semantics=("parallel", "arbitrary"),
            vmem_limit_bytes=vmem_limit,
        ),
        cost_estimate=pl.CostEstimate(
            flops=2 * nc * nc * hw,
            transcendentals=0,
            bytes_accessed=nc * hw * 4 + num_parts * nc * nc * 4,
        ),
    )(f)

    inv_norm = 1.0 / float(nc * hw)
    final_scale = float(weight) ** 2 / float(nc * nc)
    kernel2 = functools.partial(
        _combine_mse_kernel, inv_norm=inv_norm, final_scale=final_scale)

    # Tiny epilogue: combine partial Grams with the target and reduce to the loss.
    loss = pl.pallas_call(
        kernel2,
        out_shape=jax.ShapeDtypeStruct((1, 1), jnp.float32),
    )(partials, t)
    return loss[0, 0]


if __name__ == "__main__":
    key = jax.random.PRNGKey(0)
    k_x, k_style = jax.random.split(key)
    weight = 1000.0
    HI = jax.lax.Precision.HIGHEST

    # ---- Config 1: batch=2, channels=4, spatial=16; tk=128 -> 2 HW blocks so
    # the 2-part parallel reduction + combine epilogue is exercised. ----
    N, C, H, W = 2, 4, 16, 16
    x = jax.random.normal(k_x, (N, C, H, W), dtype=jnp.float32)
    style_feat = jax.random.normal(k_style, (N, C, H, W), dtype=jnp.float32)
    sf = style_feat.reshape(N * C, H * W)
    target_gram = jnp.dot(sf, sf.T, precision=HI) / float(N * C * H * W)

    loss = style_loss(x, target_gram, weight, tk=128)
    jax.block_until_ready(loss)

    nc, hw = N * C, H * W
    f32 = x.reshape(nc, hw)
    # bf16-operand reference matching the kernel's MXU precision (tight check).
    fb = f32.astype(jnp.bfloat16).astype(jnp.float32)
    gb = jnp.dot(fb, fb.T, precision=HI) / float(nc * hw)
    ref_b = jnp.mean((gb * weight - target_gram * weight) ** 2)
    # Pure f32 reference (PyTorch-parity semantics; documented bf16 tolerance).
    g32 = jnp.dot(f32, f32.T, precision=HI) / float(nc * hw)
    ref_32 = jnp.mean((g32 * weight - target_gram * weight) ** 2)
    assert jnp.allclose(loss, ref_b, rtol=1e-3, atol=1e-2), (loss, ref_b)
    assert jnp.allclose(loss, ref_32, rtol=5e-2, atol=1.0), (loss, ref_32)

    # ---- Config 2: spatial=18 -> HW=324 (not a multiple of 128) exercises the
    # in-kernel ragged-tail mask and the clamped duplicate block on the odd
    # 2-way split (3 blocks across 2 parts). ----
    H2 = W2 = 18
    x2 = jax.random.normal(k_x, (N, C, H2, W2), dtype=jnp.float32)
    sf2 = jax.random.normal(k_style, (N, C, H2, W2), dtype=jnp.float32).reshape(N * C, H2 * W2)
    tg2 = jnp.dot(sf2, sf2.T, precision=HI) / float(N * C * H2 * W2)

    loss2 = style_loss(x2, tg2, weight, tk=128)
    jax.block_until_ready(loss2)

    hw2 = H2 * W2
    f2 = x2.reshape(nc, hw2)
    f2b = f2.astype(jnp.bfloat16).astype(jnp.float32)
    g2 = jnp.dot(f2b, f2b.T, precision=HI) / float(nc * hw2)
    ref2 = jnp.mean((g2 * weight - tg2 * weight) ** 2)
    assert jnp.allclose(loss2, ref2, rtol=1e-3, atol=1e-2), (loss2, ref2)

    print("KERNEL_OK")
</pallas_src>

<mosaic_0001>
module attributes {stable_mosaic.version = 11 : i64} {
  func.func @_gram_partial_kernel(%arg0: i32, %arg1: i32, %arg2: memref<8x128xf32, #tpu.memory_space<vmem>>, %arg3: memref<1x8x8xf32, #tpu.memory_space<vmem>>) attributes {dimension_semantics = [#tpu.dimension_semantics<parallel>, #tpu.dimension_semantics<arbitrary>], iteration_bounds = array<i64: 2, 1>, scalar_prefetch = 0 : i64, scratch_operands = 0 : i64, tpu.core_type = #tpu.core_type<tc>, window_params = [{transform_indices = @transform_0, window_bounds = array<i64: 8, 128>}, {transform_indices = @transform_1, window_bounds = array<i64: 1, 8, 8>}]} {
    %c0_i32 = arith.constant 0 : i32
    %0 = arith.cmpi eq, %arg1, %c0_i32 : i32
    %1 = arith.extui %0 : i1 to i32
    %c0_i32_0 = arith.constant 0 : i32
    %2 = arith.cmpi ne, %1, %c0_i32_0 : i32
    scf.if %2 {
      %cst_8 = arith.constant 0.000000e+00 : f32
      %10 = vector.broadcast %cst_8 : f32 to vector<1x8x8xf32>
      %c0_9 = arith.constant 0 : index
      %c0_10 = arith.constant 0 : index
      %c0_11 = arith.constant 0 : index
      %11 = vector.load %arg3[%c0_9, %c0_10, %c0_11] : memref<1x8x8xf32, #tpu.memory_space<vmem>>, vector<1x8x8xf32>
      tpu.vector_store %arg3[%c0_9, %c0_10, %c0_11], %10 {strides = array<i32>} : memref<1x8x8xf32, #tpu.memory_space<vmem>>, vector<1x8x8xf32>,
    } else {
    }
    %c0 = arith.constant 0 : index
    %c0_1 = arith.constant 0 : index
    %3 = vector.load %arg2[%c0, %c0_1] : memref<8x128xf32, #tpu.memory_space<vmem>>, vector<8x128xf32>
    %4 = arith.truncf %3 : vector<8x128xf32> to vector<8x128xbf16>
    %c0_2 = arith.constant 0 : index
    %c0_3 = arith.constant 0 : index
    %c0_4 = arith.constant 0 : index
    %5 = vector.load %arg3[%c0_2, %c0_3, %c0_4] : memref<1x8x8xf32, #tpu.memory_space<vmem>>, vector<1x8x8xf32>
    %cst = arith.constant dense<0.000000e+00> : vector<8x8xf32>
    %6 = tpu.matmul %4, %4, %cst {dimension_numbers = #tpu.dot_dimension_numbers<[1], [1], [0], [0], [0, 0, 1, 0], [], []>} : vector<8x128xbf16>, vector<8x128xbf16>, vector<8x8xf32> -> vector<8x8xf32>
    %7 = vector.shape_cast %6 : vector<8x8xf32> to vector<1x8x8xf32>
    %8 = arith.addf %5, %7 : vector<1x8x8xf32>
    %c0_5 = arith.constant 0 : index
    %c0_6 = arith.constant 0 : index
    %c0_7 = arith.constant 0 : index
    %9 = vector.load %arg3[%c0_5, %c0_6, %c0_7] : memref<1x8x8xf32, #tpu.memory_space<vmem>>, vector<1x8x8xf32>
    tpu.vector_store %arg3[%c0_5, %c0_6, %c0_7], %8 {strides = array<i32>} : memref<1x8x8xf32, #tpu.memory_space<vmem>>, vector<1x8x8xf32>,
    return
  }
  func.func @transform_0(%arg0: i32, %arg1: i32) -> (i32, i32) {
    %c1_i32 = arith.constant 1 : i32
    %0 = arith.muli %arg0, %c1_i32 : i32
    %1 = arith.addi %0, %arg1 : i32
    %c0_i32 = arith.constant 0 : i32
    %c0_i32_0 = arith.constant 0 : i32
    return %c0_i32, %1 : i32, i32
  }
  func.func @transform_1(%arg0: i32, %arg1: i32) -> (i32, i32, i32) {
    %c0_i32 = arith.constant 0 : i32
    %c0_i32_0 = arith.constant 0 : i32
    %c0_i32_1 = arith.constant 0 : i32
    return %arg0, %c0_i32, %c0_i32_0 : i32, i32, i32
  }
}

</mosaic_0001>

<llo_original>
// kernel: tpu_custom_call.1
$region0: #{tpu_custom_call.1}
  #allocation0 [shape = 'u32[]', space=smem, size = 0x4, offset = 0x4, fixed_abs, tag = 'smem constant byte address 0x4 - core index']
  #allocation1 [shape = 'u32[144,128]{1,0:T(1,128)}', space=vmem, size = 0x12000, scoped, tag = 'internal scratch']
  %s0 = inlined_call_operand.hbm [shape: f32[8,256], index: 0, kind: input, shape index: {}]
  %s1 = inlined_call_operand.hbm [shape: f32[2,8,8], index: 1, kind: output, shape index: {}]
  %s2 = sld [smem:[#allocation0]]
  $region45: #{tpu_custom_call.1} parent=0
    _
  %s4 = ssub.s32 1, %s2
  %s5 = scalar_select 0, %s4, %s2
  $region1: #{tpu_custom_call.1} parent=0
    #allocation2 [shape = 'u8[8192]{0}', space=vmem, size = 0x2000, scoped, tag = 'input window, operand 0']
    #allocation3 [shape = 's32[2]{0}', space=sflag, size = 0x8, scoped, tag = 'scoped memory for tpu_custom_call.1']
    #allocation4 [shape = 's32[2]{0}', space=sflag, size = 0x8, scoped, tag = 'scoped memory for tpu_custom_call.1']
    #allocation5 [shape = 'u8[8192]{0}', space=vmem, size = 0x2000, scoped, tag = 'output window, operand 0']
    %6 = vsyncpa [#allocation3], 0
    %s7 = scalar_lea.sflag [#allocation3], 1
    %8 = vsyncpa %s7, 0
    %9 = vsyncpa [#allocation4], 0
    %s10 = scalar_lea.sflag [#allocation4], 1
    %11 = vsyncpa %s10, 0
    loop: start=0, step=1, limit=4
    $region2: #{tpu_custom_call.1} parent=1 // loop_pre_header
      _
    $region3: #{tpu_custom_call.1} parent=1 // loop_header
      %s13 = sphi 0, %s17
      %p14 = scmp.ge.s32.totalorder %s13, 4
      %s20 = sphi 0, %s32
      %s21 = sphi 0, %s28
      %s22 = sphi 0, %s20
      %s23 = sphi 0, %s21
      %s24 = sphi 0, %s22
      %s25 = sphi 0, %s23
      %s37 = sphi 0, %s39
      %s40 = sphi 0, %s37
      %s41 = sphi 0, %s40
      %s57 = sphi 0, %s41
      %s63 = sphi 0, %s65
      %s66 = sphi 0, %s63
      %s67 = sphi 0, %s66
      %s83 = sphi 0, %s67
    $region4: #{tpu_custom_call.1} parent=1 // loop_header_branch
      %16 = sbr.rel (%p14) target = $region8
    $region5: #{tpu_custom_call.1} parent=1 // loop_body
      %s18 = ssub.s32 %s13, 1
      %s19 = ssub.s32 %s13, 2
      %s26 = sadd.s32 1, %s21
      %p27 = scmp.ge.s32.totalorder %s26, 1
      %s28 = scalar_select %p27, 0, %s26
      %s29 = sadd.s32 1, %s20
      %s30 = scalar_select %p27, %s29, %s20
      %p31 = scmp.ge.s32.totalorder %s30, 2
      %s32 = scalar_select %p31, 0, %s30
      %s33 = sadd.s32 %s20, %s21
      %s34 = sadd.s32 %s32, %s28
      %s35 = ssub.s32 %s33, %s34
      %p36 = scmp.eq.s32.totalorder %s35, 0
      %s38 = sadd.s32 %s37, 1
      %s39 = scalar_select %p36, %s37, %s38
      %p42 = pneg %p36
      %p43 = scmp.eq.s32.totalorder %s13, 1
      %p44 = por %p42, %p43
      %p45 = scmp.ne.s32.totalorder %s37, %s40
      %p46 = scmp.eq.s32.totalorder %s13, 0
      %p47 = por %p45, %p46
      %p48 = scmp.ne.s32.totalorder %s37, %s40
      %p49 = scmp.eq.s32.totalorder %s18, 1
      %p50 = por %p48, %p49
      %p51 = scmp.ne.s32.totalorder %s40, %s41
      %p52 = scmp.eq.s32.totalorder %s18, 0
      %p53 = por %p51, %p52
      %p54 = scmp.ne.s32.totalorder %s40, %s41
      %p55 = scmp.eq.s32.totalorder %s19, 1
      %p56 = por %p54, %p55
      %p58 = scmp.ne.s32.totalorder %s41, %s57
      %p59 = scmp.eq.s32.totalorder %s19, 0
      %p60 = por %p58, %p59
      %s61 = ssub.s32 %s20, %s32
      %p62 = scmp.eq.s32.totalorder %s61, 0
      %s64 = sadd.s32 %s63, 1
      %s65 = scalar_select %p62, %s63, %s64
      %p68 = pneg %p62
      %p69 = scmp.eq.s32.totalorder %s13, 1
      %p70 = por %p68, %p69
      %p71 = scmp.ne.s32.totalorder %s63, %s66
      %p72 = scmp.eq.s32.totalorder %s13, 0
      %p73 = por %p71, %p72
      %p74 = scmp.ne.s32.totalorder %s63, %s66
      %p75 = scmp.eq.s32.totalorder %s18, 1
      %p76 = por %p74, %p75
      %p77 = scmp.ne.s32.totalorder %s66, %s67
      %p78 = scmp.eq.s32.totalorder %s18, 0
      %p79 = por %p77, %p78
      %p80 = scmp.ne.s32.totalorder %s66, %s67
      %p81 = scmp.eq.s32.totalorder %s19, 1
      %p82 = por %p80, %p81
      %p84 = scmp.ne.s32.totalorder %s67, %s83
      %p85 = scmp.eq.s32.totalorder %s19, 0
      %p86 = por %p84, %p85
      %p87 = scmp.le.s32.totalorder 1, %s13
      %p88 = scmp.lt.s32.totalorder %s13, 3
      %p89 = pnand %p87, %p88
      %p90 = pneg %p89
      // Predicated region
      $region9: #{tpu_custom_call.1} parent=5 // pred_check
        _
      $region10: #{tpu_custom_call.1} parent=5 // pred_check_branch
        %92 = sbr.rel (%p89) target = $region12
      $region11: #{tpu_custom_call.1} parent=5 // pred_region
        %s93 = ssub.s32 %s13, 1
      $region12: #{tpu_custom_call.1} parent=5 // pred_fallthru
        _
      %p94 = scmp.lt.s32.totalorder %s13, 2
      // Predicated region
      $region13: #{tpu_custom_call.1} parent=5 // pred_check
        %p95 = pneg %p94
      $region14: #{tpu_custom_call.1} parent=5 // pred_check_branch
        %97 = sbr.rel (%p95) target = $region16
      $region15: #{tpu_custom_call.1} parent=5 // pred_region
        // Predicated region
        $region17: #{tpu_custom_call.1} parent=15 // pred_check
          %p98 = pneg %p47
        $region18: #{tpu_custom_call.1} parent=15 // pred_check_branch
          %100 = sbr.rel (%p98) target = $region20
        $region19: #{tpu_custom_call.1} parent=15 // pred_region
          %s101 = sand.u32 %s37, 1
          %s102 = scalar_lea.sflag [#allocation3], %s101
          %s103 = sand.u32 %s37, 1
          %s104 = smul.addr %s103, 8
          %s105 = scalar_lea.vmem [#allocation2], %s104
          %s106 = sadd.s32 %s20, %s21
          %s108 = ssub.s32 128, 128
          %109 = vsyncadd %s102, %s108
          %s110 = smul.addr %s106, 128
          %s111 = scalar_lea.hbm %s0, %s110
          %s113 = sshll.u32 %s105, 4
          %s114 = int_to_ptr.vmem [resolvable:$true] %s113
          %116 = dma.hbm_to_vmem [thread:$0]  %s111, 128, %s114, %s102
        $region20: #{tpu_custom_call.1} parent=15 // pred_fallthru
          _
      $region16: #{tpu_custom_call.1} parent=5 // pred_fallthru
        _
      %p117 = scmp.le.s32.totalorder 1, %s13
      %p118 = scmp.lt.s32.totalorder %s13, 3
      %p119 = pnand %p117, %p118
      %p120 = pneg %p119
      // Predicated region
      $region21: #{tpu_custom_call.1} parent=5 // pred_check
        _
      $region22: #{tpu_custom_call.1} parent=5 // pred_check_branch
        %122 = sbr.rel (%p119) target = $region24
      $region23: #{tpu_custom_call.1} parent=5 // pred_region
        %s123 = ssub.s32 %s13, 1
        %s124 = sand.u32 %s40, 1
        %s125 = scalar_lea.sflag [#allocation3], %s124
        %s126 = sand.u32 %s40, 1
        %s127 = smul.addr %s126, 8
        %s128 = scalar_lea.vmem [#allocation2], %s127
        // Predicated region
        $region25: #{tpu_custom_call.1} parent=23 // pred_check
          %p129 = pneg %p53
        $region26: #{tpu_custom_call.1} parent=23 // pred_check_branch
          %131 = sbr.rel (%p129) target = $region28
        $region27: #{tpu_custom_call.1} parent=23 // pred_region
          %132 = dma.done %s125, 128
        $region28: #{tpu_custom_call.1} parent=23 // pred_fallthru
          _
        %s133 = sand.u32 %s40, 1
        %s134 = scalar_lea.sflag [#allocation3], %s133
        %s135 = sand.u32 %s40, 1
        %s136 = smul.addr %s135, 8
        %s137 = scalar_lea.vmem [#allocation2], %s136
        %p138 = pneg %p53
        %p139 = pneg %p50
        %p140 = pneg %p79
        %p141 = pneg %p76
        %s142 = sand.u32 %s66, 1
        %s143 = scalar_lea.sflag [#allocation4], %s142
        %s144 = sand.u32 %s66, 1
        %s145 = smul.addr %s144, 8
        %s146 = scalar_lea.vmem [#allocation5], %s145
        %s147 = sadd.s32 %s22, %s23
        %p149 = scmp.eq.s32.totalorder %s23, 0
        // Predicated region
        $region29: #{tpu_custom_call.1} parent=23 // pred_check
          %p150 = pneg %p149
        $region30: #{tpu_custom_call.1} parent=23 // pred_check_branch
          %152 = sbr.rel (%p150) target = $region32
        $region31: #{tpu_custom_call.1} parent=23 // pred_region
          %vm153 = vcmask 64512
          %154 = vst.msk [vmem:[%s146] sm:$0xff] %vm153, 0.0
        $region32: #{tpu_custom_call.1} parent=23 // pred_fallthru
          _
        %v155 = vld [vmem:[%s128] sm:$0xff]
        %v156 = vpack.c.bf16 %v155, %v155
        %v157 = vld [vmem:[%s146] sm:$0xff]
        %158 = vmatprep.subr.bf16.mxu0 0
        %159 = vmatpush1.bf16.xpose.msra.mxu0 %v156
        %160 = vmatprep.subr.bf16.mxu0 0
        %161 = vmatpush1.bf16.xpose.msra.mxu0 0
        %162 = vmatprep.subr.bf16.mxu0 0
        %163 = vmatpush1.bf16.xpose.msra.mxu0 0
        %164 = vmatprep.subr.bf16.mxu0 0
        %165 = vmatpush1.bf16.xpose.msra.mxu0 0
        %166 = vmatprep.subr.bf16.mxu0 0
        %167 = vmatpush1.bf16.xpose.msra.mxu0 0
        %168 = vmatprep.subr.bf16.mxu0 0
        %169 = vmatpush1.bf16.xpose.msra.mxu0 0
        %170 = vmatprep.subr.bf16.mxu0 0
        %171 = vmatpush1.bf16.xpose.msra.mxu0 0
        %172 = vmatprep.subr.bf16.mxu0 0
        %173 = vmatpush1.bf16.xpose.msra.mxu0 0
        %174 = vmatprep.subr.bf16.mxu0 0
        %175 = vmatpush1.bf16.xpose.msra.mxu0 0
        %176 = vmatprep.subr.bf16.mxu0 0
        %177 = vmatpush1.bf16.xpose.msra.mxu0 0
        %178 = vmatprep.subr.bf16.mxu0 0
        %179 = vmatpush1.bf16.xpose.msra.mxu0 0
        %180 = vmatprep.subr.bf16.mxu0 0
        %181 = vmatpush1.bf16.xpose.msra.mxu0 0
        %182 = vmatprep.subr.bf16.mxu0 0
        %183 = vmatpush1.bf16.xpose.msra.mxu0 0
        %184 = vmatprep.subr.bf16.mxu0 0
        %185 = vmatpush1.bf16.xpose.msra.mxu0 0
        %186 = vmatprep.subr.bf16.mxu0 0
        %187 = vmatpush1.bf16.xpose.msra.mxu0 0
        %188 = vmatprep.subr.bf16.mxu0 0
        %189 = vmatpush1.bf16.xpose.msra.mxu0 0
        %190 = vmatprep.mubr.bf16.mxu0 0
        %191 = vmatmul.mubr.bf16.gmra.mrb[0].mxu0 %v156
        %v192 = vpop.f32.mrb[0].mxu0
        %v193 = vadd.f32 0.0, %v192
        %v194 = vpop.f32.mrb[0].mxu0
        %v195 = vpop.f32.mrb[0].mxu0
        %v196 = vpop.f32.mrb[0].mxu0
        %197 = vdwg.mxu0
        %v198 = vadd.f32 %v157, %v193
        %vm199 = vcmask 64512
        %200 = vst.msk [vmem:[%s146] sm:$0xff] %vm199, %v198
        %s201 = sand.u32 %s66, 1
        %s202 = scalar_lea.sflag [#allocation4], %s201
        %s203 = sand.u32 %s66, 1
        %s204 = smul.addr %s203, 8
        %s205 = scalar_lea.vmem [#allocation5], %s204
        // Predicated region
        $region33: #{tpu_custom_call.1} parent=23 // pred_check
          %p206 = pneg %p76
        $region34: #{tpu_custom_call.1} parent=23 // pred_check_branch
          %208 = sbr.rel (%p206) target = $region36
        $region35: #{tpu_custom_call.1} parent=23 // pred_region
          %s210 = ssub.s32 128, 128
          %211 = vsyncadd %s202, %s210
          %s212 = smul.addr %s22, 128
          %s213 = scalar_lea.hbm %s1, %s212
          %s215 = sshll.u32 %s205, 4
          %s216 = int_to_ptr.vmem [resolvable:$true] %s215
          %218 = dma.vmem_to_hbm [thread:$0]  %s216, 128, %s213, %s202
        $region36: #{tpu_custom_call.1} parent=23 // pred_fallthru
          _
      $region24: #{tpu_custom_call.1} parent=5 // pred_fallthru
        _
      %p219 = scmp.le.s32.totalorder 2, %s13
      // Predicated region
      $region37: #{tpu_custom_call.1} parent=5 // pred_check
        %p220 = pneg %p219
      $region38: #{tpu_custom_call.1} parent=5 // pred_check_branch
        %222 = sbr.rel (%p220) target = $region40
      $region39: #{tpu_custom_call.1} parent=5 // pred_region
        %s223 = ssub.s32 %s13, 2
        // Predicated region
        $region41: #{tpu_custom_call.1} parent=39 // pred_check
          %p224 = pneg %p82
        $region42: #{tpu_custom_call.1} parent=39 // pred_check_branch
          %226 = sbr.rel (%p224) target = $region44
        $region43: #{tpu_custom_call.1} parent=39 // pred_region
          %s227 = sand.u32 %s67, 1
          %s228 = scalar_lea.sflag [#allocation4], %s227
          %s229 = sand.u32 %s67, 1
          %s230 = smul.addr %s229, 8
          %s231 = scalar_lea.vmem [#allocation5], %s230
          %232 = dma.done %s228, 128
        $region44: #{tpu_custom_call.1} parent=39 // pred_fallthru
          _
      $region40: #{tpu_custom_call.1} parent=5 // pred_fallthru
        _
    $region6: #{tpu_custom_call.1} parent=1 // loop_footer
      %s17 = sadd.s32 1, %s13
    $region7: #{tpu_custom_call.1} parent=1 // loop_footer_branch
      %12 = sbr.rel target = $region3
    $region8: #{tpu_custom_call.1} parent=1 // loop_exit
      _
    %233 = vsyncpa [#allocation3], 1
    %s234 = scalar_lea.sflag [#allocation3], 1
    %235 = vsyncpa %s234, 1
    %236 = vsyncpa [#allocation4], 1
    %s237 = scalar_lea.sflag [#allocation4], 1
    %238 = vsyncpa %s237, 1

</llo_original>
